<compile_context>
chip_gen: v7x
topology: tpu7x:2x2x1
jax: 0.10.0
libtpu: 0.0.40
codegen_flags: <defaults>
</compile_context>

<pallas_src>
import math
import numpy as np

import jax
import jax.numpy as jnp
from jax.experimental import pallas as pl
from jax.experimental.pallas import tpu as pltpu


# --------------------------------------------------------------------------------------
# Host-side construction (float64, cast to f32 at the very end)
# --------------------------------------------------------------------------------------
def _ker1d(size, sigma):
    # matches gauss_kernel() in mask_utils.py (scipy.stats.norm.cdf == 0.5*(1+erf(x/sqrt2)))
    interval = (2 * sigma + 1.0) / size
    x = np.linspace(-sigma - interval / 2.0, sigma + interval / 2.0, size + 1)
    cdf = np.array([0.5 * (1.0 + math.erf(v / math.sqrt(2.0))) for v in x], dtype=np.float64)
    return np.diff(cdf)


def gauss_kernel_2d(size, sigma):
    """Normalized (size, size) kernel exactly as in the reference gauss_kernel()."""
    a = _ker1d(size, sigma)
    kernel_raw = np.sqrt(np.outer(a, a))
    return kernel_raw / kernel_raw.sum()


def gauss_taps_1d(size, sigma):
    """1-D taps b with outer(b, b) == gauss_kernel_2d (exact: kernel_raw = outer(sqrt a, sqrt a))."""
    a = _ker1d(size, sigma)
    b = np.sqrt(a)
    return b / b.sum()


def _reflect_index(p, n, pad):
    """Source index in [0, n) of padded position p (ReflectionPad2d / np.pad mode='reflect')."""
    if p < pad:
        return pad - p
    if p >= pad + n:
        return 2 * (n - 1) + pad - p
    return p - pad


def blur_matrix(n, size, sigma):
    """(n, n) float64 matrix M folding reflection padding + the 1-D Gaussian taps so that
       (x @ M)[:, j] == reflect-padded 1-D Gaussian blur of x along its last axis."""
    pad = size // 2
    b = gauss_taps_1d(size, sigma)
    M = np.zeros((n, n), dtype=np.float64)
    for j in range(n):              # output position
        for k in range(size):       # tap
            M[_reflect_index(j + k, n, pad), j] += b[k]
    return M


# --------------------------------------------------------------------------------------
# Pallas kernel
# --------------------------------------------------------------------------------------
def make_cdm_kernel(Nb, H, W, iters):
    def cdm_kernel(bw_ref, bh_ref, m_ref, o_ref):
        # bw_ref: (W, W) f32 VMEM — horizontal blur (x @ bw), resident across the grid
        # bh_ref: (H, H) f32 VMEM — vertical   blur (bh @ x), resident across the grid
        # m_ref : (Nb, H, W) f32 mask block
        # o_ref : (Nb, H, W) f32 output block
        bw = bw_ref[...]
        bh = bh_ref[...]

        for n in range(Nb):                      # static, small
            m = m_ref[n]                         # (H, W)

            def blur(x):
                xh = jnp.dot(x, bw, preferred_element_type=jnp.float32)   # MXU, along W
                return jnp.dot(bh, xh, preferred_element_type=jnp.float32)  # MXU, along H

            def body(_, init):
                # recompute (1 - m) here instead of keeping it live across the loop
                return blur(init) * m + (1.0 - m)

            # iterations 1 .. iters-1 update `init`; the dead last `init` update is skipped
            init = jax.lax.fori_loop(0, iters - 1, body, 1.0 - m)
            mc = blur(init) * m                  # final iteration produces mask_confidence
            o_ref[n] = mc.astype(o_ref.dtype)

    return cdm_kernel


# --------------------------------------------------------------------------------------
# Wrapper
# --------------------------------------------------------------------------------------
def confidence_driven_mask(mask, *, size=15, sigma=1.0 / 40, iters=4, images_per_block=None):
    """mask: (N, 1, H, W) float32. Matches ConfidenceDrivenMaskLayer(size, sigma, iters)."""
    N, C, H, W = mask.shape
    if C != 1:
        raise ValueError("ConfidenceDrivenMaskLayer's propagation layer uses in_channels=1")
    if iters < 1:
        raise ValueError("iters must be >= 1 (the reference returns None / crashes for iters=0)")
    pad = size // 2
    assert H > pad and W > pad, "reflection pad requires spatial dims > size//2"

    # Images per grid step: batch to amortize per-step overhead, but keep >= 2 grid
    # steps when N >= 2 so both v7x TensorCores are fed ("parallel" semantics).
    if images_per_block is None:
        images_per_block = max(1, N // 2) if N >= 2 else 1
        while N % images_per_block:
            images_per_block -= 1
    Nb = images_per_block
    assert N % Nb == 0

    # Blur matrices: fold reflection padding + separable taps; blur(x) = B_H @ (x @ B_W).
    bw = jnp.asarray(blur_matrix(W, size, sigma), dtype=jnp.float32)      # (W, W)
    bh = jnp.asarray(blur_matrix(H, size, sigma).T, dtype=jnp.float32)    # (H, H)

    x = mask.astype(jnp.float32).reshape(N, H, W)     # drop the size-1 channel (free)

    out = pl.pallas_call(
        make_cdm_kernel(Nb, H, W, iters),
        out_shape=jax.ShapeDtypeStruct((N, H, W), jnp.float32),
        grid_spec=pltpu.PrefetchScalarGridSpec(
            num_scalar_prefetch=0,
            grid=(N // Nb,),
            in_specs=[
                pl.BlockSpec((W, W), lambda g: (0, 0)),          # B_W, resident
                pl.BlockSpec((H, H), lambda g: (0, 0)),          # B_H, resident
                pl.BlockSpec((Nb, H, W), lambda g: (g, 0, 0)),   # mask block
            ],
            out_specs=pl.BlockSpec((Nb, H, W), lambda g: (g, 0, 0)),
        ),
        compiler_params=pltpu.CompilerParams(dimension_semantics=("parallel",)),
    )(bw, bh, x)
    return out.reshape(N, 1, H, W)


# --------------------------------------------------------------------------------------
# float64 numpy reference (direct 2-D conv, as in the PyTorch module)
# --------------------------------------------------------------------------------------
def reference_cdm(mask_np, size, sigma, iters):
    pad = size // 2
    k2d = gauss_kernel_2d(size, sigma)
    N, C, H, W = mask_np.shape

    def blur(x):
        xp = np.pad(x, ((pad, pad), (pad, pad)), mode="reflect")
        out = np.zeros((H, W), dtype=np.float64)
        for ky in range(size):
            for kx in range(size):
                out += k2d[ky, kx] * xp[ky:ky + H, kx:kx + W]
        return out

    result = np.zeros((N, C, H, W), dtype=np.float64)
    for n in range(N):
        m = mask_np[n, 0].astype(np.float64)
        init = 1.0 - m
        mc = None
        for _ in range(iters):
            mc = blur(init) * m
            init = mc + (1.0 - m)
        result[n, 0] = mc
    return result


if __name__ == "__main__":
    # ConfidenceDrivenMaskLayer(size=15, sigma=1/40, iters=4) -> pad = 7, single channel.
    SIZE, SIGMA, ITERS = 15, 1.0 / 40, 4
    N, C, H, W = 2, 1, 64, 128   # W=128 keeps the lane axis dense; N=2 -> 2 grid steps

    key = jax.random.PRNGKey(0)
    mask = (jax.random.uniform(key, (N, C, H, W)) < 0.25).astype(jnp.float32)

    out = confidence_driven_mask(mask, size=SIZE, sigma=SIGMA, iters=ITERS)
    out = jax.block_until_ready(out)

    ref = reference_cdm(np.asarray(mask), SIZE, SIGMA, ITERS)
    assert out.shape == (N, C, H, W)
    # Tolerance budgets for MXU f32 multi-pass rounding across 4 iterations; real
    # padding/indexing bugs produce errors >= ~5e-2 for a binary mask, so this still
    # validates the algorithm.
    np.testing.assert_allclose(np.asarray(out), ref, rtol=5e-3, atol=5e-3)

    print("KERNEL_OK")
</pallas_src>

<mosaic_0001>
module attributes {stable_mosaic.version = 11 : i64} {
  func.func @cdm_kernel(%arg0: i32, %arg1: memref<128x128xf32, #tpu.memory_space<vmem>>, %arg2: memref<64x64xf32, #tpu.memory_space<vmem>>, %arg3: memref<1x64x128xf32, #tpu.memory_space<vmem>>, %arg4: memref<1x64x128xf32, #tpu.memory_space<vmem>>) attributes {dimension_semantics = [#tpu.dimension_semantics<parallel>], iteration_bounds = array<i64: 2>, scalar_prefetch = 0 : i64, scratch_operands = 0 : i64, tpu.core_type = #tpu.core_type<tc>, window_params = [{pipeline_mode = #tpu.pipeline_mode<synchronous>, transform_indices = @transform_0, window_bounds = array<i64: 128, 128>}, {pipeline_mode = #tpu.pipeline_mode<synchronous>, transform_indices = @transform_1, window_bounds = array<i64: 64, 64>}, {transform_indices = @transform_2, window_bounds = array<i64: 1, 64, 128>}, {transform_indices = @transform_3, window_bounds = array<i64: 1, 64, 128>}]} {
    %c0 = arith.constant 0 : index
    %c0_0 = arith.constant 0 : index
    %0 = vector.load %arg1[%c0, %c0_0] : memref<128x128xf32, #tpu.memory_space<vmem>>, vector<128x128xf32>
    %c0_1 = arith.constant 0 : index
    %c0_2 = arith.constant 0 : index
    %1 = vector.load %arg2[%c0_1, %c0_2] : memref<64x64xf32, #tpu.memory_space<vmem>>, vector<64x64xf32>
    %c0_3 = arith.constant 0 : index
    %c0_4 = arith.constant 0 : index
    %c0_5 = arith.constant 0 : index
    %2 = vector.load %arg3[%c0_3, %c0_4, %c0_5] : memref<1x64x128xf32, #tpu.memory_space<vmem>>, vector<1x64x128xf32>
    %3 = vector.shape_cast %2 : vector<1x64x128xf32> to vector<64x128xf32>
    %cst = arith.constant 1.000000e+00 : f32
    %4 = vector.broadcast %cst : f32 to vector<64x128xf32>
    %5 = arith.subf %4, %3 : vector<64x128xf32>
    %c0_i32 = arith.constant 0 : i32
    %c3_i32 = arith.constant 3 : i32
    %6 = arith.addi %c0_i32, %c3_i32 : i32
    %c1_i32 = arith.constant 1 : i32
    %7 = scf.for %arg5 = %c0_i32 to %6 step %c1_i32 iter_args(%arg6 = %5) -> (vector<64x128xf32>)  : i32 {
      %cst_11 = arith.constant dense<0.000000e+00> : vector<64x128xf32>
      %14 = tpu.matmul %arg6, %0, %cst_11 {dimension_numbers = #tpu.dot_dimension_numbers<[1], [0], [0], [1], [0, 0, 1, 1], [], []>} : vector<64x128xf32>, vector<128x128xf32>, vector<64x128xf32> -> vector<64x128xf32>
      %cst_12 = arith.constant dense<0.000000e+00> : vector<64x128xf32>
      %15 = tpu.matmul %1, %14, %cst_12 {dimension_numbers = #tpu.dot_dimension_numbers<[1], [0], [0], [1], [0, 0, 1, 1], [], []>} : vector<64x64xf32>, vector<64x128xf32>, vector<64x128xf32> -> vector<64x128xf32>
      %16 = arith.mulf %15, %3 : vector<64x128xf32>
      %cst_13 = arith.constant 1.000000e+00 : f32
      %17 = vector.broadcast %cst_13 : f32 to vector<64x128xf32>
      %18 = arith.subf %17, %3 : vector<64x128xf32>
      %19 = arith.addf %16, %18 : vector<64x128xf32>
      scf.yield %19 : vector<64x128xf32>
    }
    %cst_6 = arith.constant dense<0.000000e+00> : vector<64x128xf32>
    %8 = tpu.matmul %7, %0, %cst_6 {dimension_numbers = #tpu.dot_dimension_numbers<[1], [0], [0], [1], [0, 0, 1, 1], [], []>} : vector<64x128xf32>, vector<128x128xf32>, vector<64x128xf32> -> vector<64x128xf32>
    %cst_7 = arith.constant dense<0.000000e+00> : vector<64x128xf32>
    %9 = tpu.matmul %1, %8, %cst_7 {dimension_numbers = #tpu.dot_dimension_numbers<[1], [0], [0], [1], [0, 0, 1, 1], [], []>} : vector<64x64xf32>, vector<64x128xf32>, vector<64x128xf32> -> vector<64x128xf32>
    %10 = arith.mulf %9, %3 : vector<64x128xf32>
    %c0_8 = arith.constant 0 : index
    %c0_9 = arith.constant 0 : index
    %c0_10 = arith.constant 0 : index
    %11 = vector.load %arg4[%c0_8, %c0_9, %c0_10] : memref<1x64x128xf32, #tpu.memory_space<vmem>>, vector<1x64x128xf32>
    %12 = vector.shape_cast %11 : vector<1x64x128xf32> to vector<64x128xf32>
    %13 = vector.shape_cast %10 : vector<64x128xf32> to vector<1x64x128xf32>
    tpu.vector_store %arg4[%c0_8, %c0_9, %c0_10], %13 {strides = array<i32>} : memref<1x64x128xf32, #tpu.memory_space<vmem>>, vector<1x64x128xf32>,
    return
  }
  func.func @transform_0(%arg0: i32) -> (i32, i32) {
    %c0_i32 = arith.constant 0 : i32
    %c0_i32_0 = arith.constant 0 : i32
    %c0_i32_1 = arith.constant 0 : i32
    return %c0_i32, %c0_i32_0 : i32, i32
  }
  func.func @transform_1(%arg0: i32) -> (i32, i32) {
    %c0_i32 = arith.constant 0 : i32
    %c0_i32_0 = arith.constant 0 : i32
    %c0_i32_1 = arith.constant 0 : i32
    return %c0_i32, %c0_i32_0 : i32, i32
  }
  func.func @transform_2(%arg0: i32) -> (i32, i32, i32) {
    %c0_i32 = arith.constant 0 : i32
    %c0_i32_0 = arith.constant 0 : i32
    %c0_i32_1 = arith.constant 0 : i32
    return %arg0, %c0_i32, %c0_i32_0 : i32, i32, i32
  }
  func.func @transform_3(%arg0: i32) -> (i32, i32, i32) {
    %c0_i32 = arith.constant 0 : i32
    %c0_i32_0 = arith.constant 0 : i32
    %c0_i32_1 = arith.constant 0 : i32
    return %arg0, %c0_i32, %c0_i32_0 : i32, i32, i32
  }
}

</mosaic_0001>

<llo_original>
// kernel: tpu_custom_call.1
$region0: #{tpu_custom_call.1}
  #allocation0 [shape = 'u32[]', space=smem, size = 0x4, offset = 0x4, fixed_abs, tag = 'smem constant byte address 0x4 - core index']
  #allocation1 [shape = 'u32[144,128]{1,0:T(1,128)}', space=vmem, size = 0x12000, scoped, tag = 'internal scratch']
  %s0 = inlined_call_operand.hbm [shape: f32[128,128], index: 0, kind: input, shape index: {}]
  %s1 = inlined_call_operand.hbm [shape: f32[64,64], index: 1, kind: input, shape index: {}]
  %s2 = inlined_call_operand.hbm [shape: f32[2,64,128], index: 2, kind: input, shape index: {}]
  %s3 = inlined_call_operand.hbm [shape: f32[2,64,128], index: 3, kind: output, shape index: {}]
  %s4 = sld [smem:[#allocation0]]
  $region64: #{tpu_custom_call.1} parent=0
    _
  %s6 = ssub.s32 1, %s4
  %s7 = scalar_select 0, %s6, %s4
  $region1: #{tpu_custom_call.1} parent=0
    #allocation2 [shape = 'u8[65536]{0}', space=vmem, size = 0x10000, scoped, tag = 'input window, operand 0, single buffered']
    #allocation3 [shape = 's32[2]{0}', space=sflag, size = 0x8, scoped, tag = 'scoped memory for tpu_custom_call.1']
    #allocation4 [shape = 's32[2]{0}', space=sflag, size = 0x8, scoped, tag = 'scoped memory for tpu_custom_call.1']
    #allocation5 [shape = 'u8[32768]{0}', space=vmem, size = 0x8000, scoped, tag = 'input window, operand 1, single buffered']
    #allocation6 [shape = 's32[1]{0}', space=sflag, size = 0x4, scoped, tag = 'scoped memory for tpu_custom_call.1']
    #allocation7 [shape = 'u8[65536]{0}', space=vmem, size = 0x10000, scoped, tag = 'input window, operand 2']
    #allocation8 [shape = 'u8[65536]{0}', space=vmem, size = 0x10000, scoped, tag = 'output window, operand 0']
    %8 = vsyncpa [#allocation3], 0
    %9 = vsyncpa [#allocation6], 0
    %10 = vsyncpa [#allocation4], 0
    %s11 = scalar_lea.sflag [#allocation4], 1
    %12 = vsyncpa %s11, 0
    loop: start=0, step=1, limit=4
    $region2: #{tpu_custom_call.1} parent=1 // loop_pre_header
      _
    $region3: #{tpu_custom_call.1} parent=1 // loop_header
      %s14 = sphi 0, %s18
      %p15 = scmp.ge.s32.totalorder %s14, 4
      %s22 = sphi 0, %s22
      %s24 = sphi 0, %s22
      %s25 = sphi 0, %s24
      %s39 = sphi 0, %s25
      %s43 = sphi 0, %s43
      %s45 = sphi 0, %s43
      %s46 = sphi 0, %s45
      %s60 = sphi 0, %s46
      %s66 = sphi 0, %s68
      %s69 = sphi 0, %s66
      %s70 = sphi 0, %s69
      %s86 = sphi 0, %s70
      %s92 = sphi 0, %s94
      %s95 = sphi 0, %s92
      %s96 = sphi 0, %s95
      %s112 = sphi 0, %s96
    $region4: #{tpu_custom_call.1} parent=1 // loop_header_branch
      %17 = sbr.rel (%p15) target = $region8
    $region5: #{tpu_custom_call.1} parent=1 // loop_body
      %s19 = ssub.s32 %s14, 1
      %s20 = ssub.s32 %s14, 2
      %s21 = sadd.s32 %s14, 1
      %s23 = sadd.s32 %s22, 1
      %p26 = scmp.eq.s32.totalorder %s14, 1
      %p27 = scmp.ne.s32.totalorder %s22, %s24
      %p28 = scmp.eq.s32.totalorder %s14, 0
      %p29 = por %p27, %p28
      %p30 = scmp.ne.s32.totalorder %s22, %s24
      %p31 = scmp.eq.s32.totalorder %s19, 1
      %p32 = por %p30, %p31
      %p33 = scmp.ne.s32.totalorder %s24, %s25
      %p34 = scmp.eq.s32.totalorder %s19, 0
      %p35 = por %p33, %p34
      %p36 = scmp.ne.s32.totalorder %s24, %s25
      %p37 = scmp.eq.s32.totalorder %s20, 1
      %p38 = por %p36, %p37
      %p40 = scmp.ne.s32.totalorder %s25, %s39
      %p41 = scmp.eq.s32.totalorder %s20, 0
      %p42 = por %p40, %p41
      %s44 = sadd.s32 %s43, 1
      %p47 = scmp.eq.s32.totalorder %s14, 1
      %p48 = scmp.ne.s32.totalorder %s43, %s45
      %p49 = scmp.eq.s32.totalorder %s14, 0
      %p50 = por %p48, %p49
      %p51 = scmp.ne.s32.totalorder %s43, %s45
      %p52 = scmp.eq.s32.totalorder %s19, 1
      %p53 = por %p51, %p52
      %p54 = scmp.ne.s32.totalorder %s45, %s46
      %p55 = scmp.eq.s32.totalorder %s19, 0
      %p56 = por %p54, %p55
      %p57 = scmp.ne.s32.totalorder %s45, %s46
      %p58 = scmp.eq.s32.totalorder %s20, 1
      %p59 = por %p57, %p58
      %p61 = scmp.ne.s32.totalorder %s46, %s60
      %p62 = scmp.eq.s32.totalorder %s20, 0
      %p63 = por %p61, %p62
      %s64 = ssub.s32 %s14, %s21
      %p65 = scmp.eq.s32.totalorder %s64, 0
      %s67 = sadd.s32 %s66, 1
      %s68 = scalar_select %p65, %s66, %s67
      %p71 = pneg %p65
      %p72 = scmp.eq.s32.totalorder %s14, 1
      %p73 = por %p71, %p72
      %p74 = scmp.ne.s32.totalorder %s66, %s69
      %p75 = scmp.eq.s32.totalorder %s14, 0
      %p76 = por %p74, %p75
      %p77 = scmp.ne.s32.totalorder %s66, %s69
      %p78 = scmp.eq.s32.totalorder %s19, 1
      %p79 = por %p77, %p78
      %p80 = scmp.ne.s32.totalorder %s69, %s70
      %p81 = scmp.eq.s32.totalorder %s19, 0
      %p82 = por %p80, %p81
      %p83 = scmp.ne.s32.totalorder %s69, %s70
      %p84 = scmp.eq.s32.totalorder %s20, 1
      %p85 = por %p83, %p84
      %p87 = scmp.ne.s32.totalorder %s70, %s86
      %p88 = scmp.eq.s32.totalorder %s20, 0
      %p89 = por %p87, %p88
      %s90 = ssub.s32 %s14, %s21
      %p91 = scmp.eq.s32.totalorder %s90, 0
      %s93 = sadd.s32 %s92, 1
      %s94 = scalar_select %p91, %s92, %s93
      %p97 = pneg %p91
      %p98 = scmp.eq.s32.totalorder %s14, 1
      %p99 = por %p97, %p98
      %p100 = scmp.ne.s32.totalorder %s92, %s95
      %p101 = scmp.eq.s32.totalorder %s14, 0
      %p102 = por %p100, %p101
      %p103 = scmp.ne.s32.totalorder %s92, %s95
      %p104 = scmp.eq.s32.totalorder %s19, 1
      %p105 = por %p103, %p104
      %p106 = scmp.ne.s32.totalorder %s95, %s96
      %p107 = scmp.eq.s32.totalorder %s19, 0
      %p108 = por %p106, %p107
      %p109 = scmp.ne.s32.totalorder %s95, %s96
      %p110 = scmp.eq.s32.totalorder %s20, 1
      %p111 = por %p109, %p110
      %p113 = scmp.ne.s32.totalorder %s96, %s112
      %p114 = scmp.eq.s32.totalorder %s20, 0
      %p115 = por %p113, %p114
      %p116 = scmp.le.s32.totalorder 1, %s14
      %p117 = scmp.lt.s32.totalorder %s14, 3
      %p118 = pnand %p116, %p117
      %p119 = pneg %p118
      // Predicated region
      $region9: #{tpu_custom_call.1} parent=5 // pred_check
        _
      $region10: #{tpu_custom_call.1} parent=5 // pred_check_branch
        %121 = sbr.rel (%p118) target = $region12
      $region11: #{tpu_custom_call.1} parent=5 // pred_region
        %s122 = ssub.s32 %s14, 1
        // Predicated region
        $region13: #{tpu_custom_call.1} parent=11 // pred_check
          %p123 = pneg %p35
        $region14: #{tpu_custom_call.1} parent=11 // pred_check_branch
          %125 = sbr.rel (%p123) target = $region16
        $region15: #{tpu_custom_call.1} parent=11 // pred_region
          %s127 = ssub.s32 2048, 2048
          %128 = vsyncadd [#allocation3], %s127
          %s129 = sshll.u32 [#allocation2], 4
          %s130 = int_to_ptr.vmem [resolvable:$true] %s129
          %135 = dma.hbm_to_vmem [thread:$0]  %s0, 2048, %s130, [#allocation3], 128, 128, 8
        $region16: #{tpu_custom_call.1} parent=11 // pred_fallthru
          _
        // Predicated region
        $region17: #{tpu_custom_call.1} parent=11 // pred_check
          %p136 = pneg %p56
        $region18: #{tpu_custom_call.1} parent=11 // pred_check_branch
          %138 = sbr.rel (%p136) target = $region20
        $region19: #{tpu_custom_call.1} parent=11 // pred_region
          %s140 = ssub.s32 1024, 1024
          %141 = vsyncadd [#allocation6], %s140
          %s142 = sshll.u32 [#allocation5], 4
          %s143 = int_to_ptr.vmem [resolvable:$true] %s142
          %148 = dma.hbm_to_vmem [thread:$0]  %s1, 1024, %s143, [#allocation6], 128, 128, 8
        $region20: #{tpu_custom_call.1} parent=11 // pred_fallthru
          _
      $region12: #{tpu_custom_call.1} parent=5 // pred_fallthru
        _
      %p149 = scmp.lt.s32.totalorder %s14, 2
      // Predicated region
      $region21: #{tpu_custom_call.1} parent=5 // pred_check
        %p150 = pneg %p149
      $region22: #{tpu_custom_call.1} parent=5 // pred_check_branch
        %152 = sbr.rel (%p150) target = $region24
      $region23: #{tpu_custom_call.1} parent=5 // pred_region
        // Predicated region
        $region25: #{tpu_custom_call.1} parent=23 // pred_check
          %p153 = pneg %p76
        $region26: #{tpu_custom_call.1} parent=23 // pred_check_branch
          %155 = sbr.rel (%p153) target = $region28
        $region27: #{tpu_custom_call.1} parent=23 // pred_region
          %s156 = sand.u32 %s14, 1
          %s157 = scalar_lea.sflag [#allocation3], %s156
          %s158 = sand.u32 %s66, 1
          %s159 = smul.addr %s158, 64
          %s160 = scalar_lea.vmem [#allocation7], %s159
          %s162 = ssub.s32 1024, 1024
          %163 = vsyncadd %s157, %s162
          %s164 = smul.addr %s14, 8
          %s165 = smul.addr %s164, 128
          %s166 = scalar_lea.hbm %s2, %s165
          %s167 = sshll.u32 %s160, 4
          %s168 = int_to_ptr.vmem [resolvable:$true] %s167
          %173 = dma.hbm_to_vmem [thread:$0]  %s166, 1024, %s168, %s157, 128, 128, 8
        $region28: #{tpu_custom_call.1} parent=23 // pred_fallthru
          _
      $region24: #{tpu_custom_call.1} parent=5 // pred_fallthru
        _
      %p174 = scmp.le.s32.totalorder 1, %s14
      %p175 = scmp.lt.s32.totalorder %s14, 3
      %p176 = pnand %p174, %p175
      %p177 = pneg %p176
      // Predicated region
      $region29: #{tpu_custom_call.1} parent=5 // pred_check
        _
      $region30: #{tpu_custom_call.1} parent=5 // pred_check_branch
        %179 = sbr.rel (%p176) target = $region32
      $region31: #{tpu_custom_call.1} parent=5 // pred_region
        %s180 = ssub.s32 %s14, 1
        // Predicated region
        $region33: #{tpu_custom_call.1} parent=31 // pred_check
          %p181 = pneg %p35
        $region34: #{tpu_custom_call.1} parent=31 // pred_check_branch
          %183 = sbr.rel (%p181) target = $region36
        $region35: #{tpu_custom_call.1} parent=31 // pred_region
          %184 = dma.done [#allocation3], 2048
        $region36: #{tpu_custom_call.1} parent=31 // pred_fallthru
          _
        // Predicated region
        $region37: #{tpu_custom_call.1} parent=31 // pred_check
          %p185 = pneg %p56
        $region38: #{tpu_custom_call.1} parent=31 // pred_check_branch
          %187 = sbr.rel (%p185) target = $region40
        $region39: #{tpu_custom_call.1} parent=31 // pred_region
          %188 = dma.done [#allocation6], 1024
        $region40: #{tpu_custom_call.1} parent=31 // pred_fallthru
          _
        %s189 = sand.u32 %s19, 1
        %s190 = scalar_lea.sflag [#allocation3], %s189
        %s191 = sand.u32 %s69, 1
        %s192 = smul.addr %s191, 64
        %s193 = scalar_lea.vmem [#allocation7], %s192
        // Predicated region
        $region41: #{tpu_custom_call.1} parent=31 // pred_check
          %p194 = pneg %p82
        $region42: #{tpu_custom_call.1} parent=31 // pred_check_branch
          %196 = sbr.rel (%p194) target = $region44
        $region43: #{tpu_custom_call.1} parent=31 // pred_region
          %197 = dma.done %s190, 1024
        $region44: #{tpu_custom_call.1} parent=31 // pred_fallthru
          _
        %p198 = pneg %p35
        %p199 = pneg %p32
        %p200 = pneg %p56
        %p201 = pneg %p53
        %s202 = sand.u32 %s19, 1
        %s203 = scalar_lea.sflag [#allocation3], %s202
        %s204 = sand.u32 %s69, 1
        %s205 = smul.addr %s204, 64
        %s206 = scalar_lea.vmem [#allocation7], %s205
        %p207 = pneg %p82
        %p208 = pneg %p79
        %p209 = pneg %p108
        %p210 = pneg %p105
        %s211 = sand.u32 %s95, 1
        %s212 = scalar_lea.sflag [#allocation4], %s211
        %s213 = sand.u32 %s95, 1
        %s214 = smul.addr %s213, 64
        %s215 = scalar_lea.vmem [#allocation8], %s214
        %v216 = vld [vmem:[#allocation2] sm:$0xff]
        %v217 = vld [vmem:[#allocation2 + $0x8] sm:$0xff]
        %v218 = vld [vmem:[#allocation2 + $0x10] sm:$0xff]
        %v219 = vld [vmem:[#allocation2 + $0x18] sm:$0xff]
        %v220 = vld [vmem:[#allocation2 + $0x20] sm:$0xff]
        %v221 = vld [vmem:[#allocation2 + $0x28] sm:$0xff]
        %v222 = vld [vmem:[#allocation2 + $0x30] sm:$0xff]
        %v223 = vld [vmem:[#allocation2 + $0x38] sm:$0xff]
        %v224 = vld [vmem:[#allocation2 + $0x40] sm:$0xff]
        %v225 = vld [vmem:[#allocation2 + $0x48] sm:$0xff]
        %v226 = vld [vmem:[#allocation2 + $0x50] sm:$0xff]
        %v227 = vld [vmem:[#allocation2 + $0x58] sm:$0xff]
        %v228 = vld [vmem:[#allocation2 + $0x60] sm:$0xff]
        %v229 = vld [vmem:[#allocation2 + $0x68] sm:$0xff]
        %v230 = vld [vmem:[#allocation2 + $0x70] sm:$0xff]
        %v231 = vld [vmem:[#allocation2 + $0x78] sm:$0xff]
        %v232 = vld [vmem:[#allocation5] sm:$0xff]
        %v233 = vld [vmem:[#allocation5 + $0x8] sm:$0xff]
        %v234 = vld [vmem:[#allocation5 + $0x10] sm:$0xff]
        %v235 = vld [vmem:[#allocation5 + $0x18] sm:$0xff]
        %v236 = vld [vmem:[#allocation5 + $0x20] sm:$0xff]
        %v237 = vld [vmem:[#allocation5 + $0x28] sm:$0xff]
        %v238 = vld [vmem:[#allocation5 + $0x30] sm:$0xff]
        %v239 = vld [vmem:[#allocation5 + $0x38] sm:$0xff]
        %v240 = vld [vmem:[%s193] sm:$0xff]
        %v241 = vld [vmem:[%s193 + $0x8] sm:$0xff]
        %v242 = vld [vmem:[%s193 + $0x10] sm:$0xff]
        %v243 = vld [vmem:[%s193 + $0x18] sm:$0xff]
        %v244 = vld [vmem:[%s193 + $0x20] sm:$0xff]
        %v245 = vld [vmem:[%s193 + $0x28] sm:$0xff]
        %v246 = vld [vmem:[%s193 + $0x30] sm:$0xff]
        %v247 = vld [vmem:[%s193 + $0x38] sm:$0xff]
        %v248 = vsub.f32 1.0, %v240
        %v249 = vsub.f32 1.0, %v241
        %v250 = vsub.f32 1.0, %v242
        %v251 = vsub.f32 1.0, %v243
        %v252 = vsub.f32 1.0, %v244
        %v253 = vsub.f32 1.0, %v245
        %v254 = vsub.f32 1.0, %v246
        %v255 = vsub.f32 1.0, %v247
        loop: start=0, step=1, limit=3
        $region45: #{tpu_custom_call.1} parent=31 // loop_pre_header
          _
        $region46: #{tpu_custom_call.1} parent=31 // loop_header
          %s257 = sphi 0, %s261
          %p258 = scmp.ge.s32.totalorder %s257, 3
          %v262 = vphi %v248, %v513
          %v263 = vphi %v249, %v514
          %v264 = vphi %v250, %v515
          %v265 = vphi %v251, %v516
          %v266 = vphi %v252, %v517
          %v267 = vphi %v253, %v518
          %v268 = vphi %v254, %v519
          %v269 = vphi %v255, %v520
        $region47: #{tpu_custom_call.1} parent=31 // loop_header_branch
          %260 = sbr.rel (%p258) target = $region51
        $region48: #{tpu_custom_call.1} parent=31 // loop_body
          %270 = vmatprep.subr.mxu0 0.0
          %271 = vmatpush1.msra.mxu0 %v216
          %272 = vmatprep.subr.mxu0 0.0
          %273 = vmatpush1.msra.mxu0 %v217
          %274 = vmatprep.subr.mxu0 0.0
          %275 = vmatpush1.msra.mxu0 %v218
          %276 = vmatprep.subr.mxu0 0.0
          %277 = vmatpush1.msra.mxu0 %v219
          %278 = vmatprep.subr.mxu0 0.0
          %279 = vmatpush1.msra.mxu0 %v220
          %280 = vmatprep.subr.mxu0 0.0
          %281 = vmatpush1.msra.mxu0 %v221
          %282 = vmatprep.subr.mxu0 0.0
          %283 = vmatpush1.msra.mxu0 %v222
          %284 = vmatprep.subr.mxu0 0.0
          %285 = vmatpush1.msra.mxu0 %v223
          %286 = vmatprep.subr.mxu0 0.0
          %287 = vmatpush1.msra.mxu0 %v224
          %288 = vmatprep.subr.mxu0 0.0
          %289 = vmatpush1.msra.mxu0 %v225
          %290 = vmatprep.subr.mxu0 0.0
          %291 = vmatpush1.msra.mxu0 %v226
          %292 = vmatprep.subr.mxu0 0.0
          %293 = vmatpush1.msra.mxu0 %v227
          %294 = vmatprep.subr.mxu0 0.0
          %295 = vmatpush1.msra.mxu0 %v228
          %296 = vmatprep.subr.mxu0 0.0
          %297 = vmatpush1.msra.mxu0 %v229
          %298 = vmatprep.subr.mxu0 0.0
          %299 = vmatpush1.msra.mxu0 %v230
          %300 = vmatprep.subr.mxu0 0.0
          %301 = vmatpush1.msra.mxu0 %v231
          %302 = vmatprep.subr.mxu0 0.0
          %303 = vmatpush1.msra.mxu0 0.0
          %304 = vmatprep.subr.mxu0 0.0
          %305 = vmatpush1.msra.mxu0 0.0
          %306 = vmatprep.subr.mxu0 0.0
          %307 = vmatpush1.msra.mxu0 0.0
          %308 = vmatprep.subr.mxu0 0.0
          %309 = vmatpush1.msra.mxu0 0.0
          %310 = vmatprep.subr.mxu0 0.0
          %311 = vmatpush1.msra.mxu0 0.0
          %312 = vmatprep.subr.mxu0 0.0
          %313 = vmatpush1.msra.mxu0 0.0
          %314 = vmatprep.subr.mxu0 0.0
          %315 = vmatpush1.msra.mxu0 0.0
          %316 = vmatprep.subr.mxu0 0.0
          %317 = vmatpush1.msra.mxu0 0.0
          %318 = vmatprep.subr.mxu0 0.0
          %319 = vmatpush1.msra.mxu0 0.0
          %320 = vmatprep.subr.mxu0 0.0
          %321 = vmatpush1.msra.mxu0 0.0
          %322 = vmatprep.subr.mxu0 0.0
          %323 = vmatpush1.msra.mxu0 0.0
          %324 = vmatprep.subr.mxu0 0.0
          %325 = vmatpush1.msra.mxu0 0.0
          %326 = vmatprep.subr.mxu0 0.0
          %327 = vmatpush1.msra.mxu0 0.0
          %328 = vmatprep.subr.mxu0 0.0
          %329 = vmatpush1.msra.mxu0 0.0
          %330 = vmatprep.subr.mxu0 0.0
          %331 = vmatpush1.msra.mxu0 0.0
          %332 = vmatprep.subr.mxu0 0.0
          %333 = vmatpush1.msra.mxu0 0.0
          %334 = vmatprep.mubr.f32.mxu0 0.0
          %335 = vmatmul.mubr.f32.gmra.mrb[0].mxu0 %v262
          %v336 = vpop.f32.mrb[0].mxu0
          %v337 = vadd.f32 0.0, %v336
          %v338 = vpop.f32.mrb[0].mxu0
          %339 = vmatprep.mubr.f32.mxu0 0.0
          %340 = vmatmul.mubr.f32.gmra.mrb[0].mxu0 %v263
          %v341 = vpop.f32.mrb[0].mxu0
          %v342 = vadd.f32 0.0, %v341
          %v343 = vpop.f32.mrb[0].mxu0
          %344 = vmatprep.mubr.f32.mxu0 0.0
          %345 = vmatmul.mubr.f32.gmra.mrb[0].mxu0 %v264
          %v346 = vpop.f32.mrb[0].mxu0
          %v347 = vadd.f32 0.0, %v346
          %v348 = vpop.f32.mrb[0].mxu0
          %349 = vmatprep.mubr.f32.mxu0 0.0
          %350 = vmatmul.mubr.f32.gmra.mrb[0].mxu0 %v265
          %v351 = vpop.f32.mrb[0].mxu0
          %v352 = vadd.f32 0.0, %v351
          %v353 = vpop.f32.mrb[0].mxu0
          %354 = vmatprep.mubr.f32.mxu0 0.0
          %355 = vmatmul.mubr.f32.gmra.mrb[0].mxu0 %v266
          %v356 = vpop.f32.mrb[0].mxu0
          %v357 = vadd.f32 0.0, %v356
          %v358 = vpop.f32.mrb[0].mxu0
          %359 = vmatprep.mubr.f32.mxu0 0.0
          %360 = vmatmul.mubr.f32.gmra.mrb[0].mxu0 %v267
          %v361 = vpop.f32.mrb[0].mxu0
          %v362 = vadd.f32 0.0, %v361
          %v363 = vpop.f32.mrb[0].mxu0
          %364 = vmatprep.mubr.f32.mxu0 0.0
          %365 = vmatmul.mubr.f32.gmra.mrb[0].mxu0 %v268
          %v366 = vpop.f32.mrb[0].mxu0
          %v367 = vadd.f32 0.0, %v366
          %v368 = vpop.f32.mrb[0].mxu0
          %369 = vmatprep.mubr.f32.mxu0 0.0
          %370 = vmatmul.mubr.f32.gmra.mrb[0].mxu0 %v269
          %v371 = vpop.f32.mrb[0].mxu0
          %v372 = vadd.f32 0.0, %v371
          %v373 = vpop.f32.mrb[0].mxu0
          %374 = vdwg.mxu0
          %vm375 = vcmask 523264
          %v377 = vsel %vm375, %v232, 0
          %v380 = vsel %vm375, %v233, 0
          %v383 = vsel %vm375, %v234, 0
          %v386 = vsel %vm375, %v235, 0
          %v389 = vsel %vm375, %v236, 0
          %v392 = vsel %vm375, %v237, 0
          %v395 = vsel %vm375, %v238, 0
          %v398 = vsel %vm375, %v239, 0
          %400 = vmatprep.subr.mxu0 0.0
          %401 = vmatpush1.msra.mxu0 %v337
          %402 = vmatprep.subr.mxu0 0.0
          %403 = vmatpush1.msra.mxu0 %v342
          %404 = vmatprep.subr.mxu0 0.0
          %405 = vmatpush1.msra.mxu0 %v347
          %406 = vmatprep.subr.mxu0 0.0
          %407 = vmatpush1.msra.mxu0 %v352
          %408 = vmatprep.subr.mxu0 0.0
          %409 = vmatpush1.msra.mxu0 %v357
          %410 = vmatprep.subr.mxu0 0.0
          %411 = vmatpush1.msra.mxu0 %v362
          %412 = vmatprep.subr.mxu0 0.0
          %413 = vmatpush1.msra.mxu0 %v367
          %414 = vmatprep.subr.mxu0 0.0
          %415 = vmatpush1.msra.mxu0 %v372
          %416 = vmatprep.subr.mxu0 0.0
          %417 = vmatpush1.msra.mxu0 0.0
          %418 = vmatprep.subr.mxu0 0.0
          %419 = vmatpush1.msra.mxu0 0.0
          %420 = vmatprep.subr.mxu0 0.0
          %421 = vmatpush1.msra.mxu0 0.0
          %422 = vmatprep.subr.mxu0 0.0
          %423 = vmatpush1.msra.mxu0 0.0
          %424 = vmatprep.subr.mxu0 0.0
          %425 = vmatpush1.msra.mxu0 0.0
          %426 = vmatprep.subr.mxu0 0.0
          %427 = vmatpush1.msra.mxu0 0.0
          %428 = vmatprep.subr.mxu0 0.0
          %429 = vmatpush1.msra.mxu0 0.0
          %430 = vmatprep.subr.mxu0 0.0
          %431 = vmatpush1.msra.mxu0 0.0
          %432 = vmatprep.subr.mxu0 0.0
          %433 = vmatpush1.msra.mxu0 0.0
          %434 = vmatprep.subr.mxu0 0.0
          %435 = vmatpush1.msra.mxu0 0.0
          %436 = vmatprep.subr.mxu0 0.0
          %437 = vmatpush1.msra.mxu0 0.0
          %438 = vmatprep.subr.mxu0 0.0
          %439 = vmatpush1.msra.mxu0 0.0
          %440 = vmatprep.subr.mxu0 0.0
          %441 = vmatpush1.msra.mxu0 0.0
          %442 = vmatprep.subr.mxu0 0.0
          %443 = vmatpush1.msra.mxu0 0.0
          %444 = vmatprep.subr.mxu0 0.0
          %445 = vmatpush1.msra.mxu0 0.0
          %446 = vmatprep.subr.mxu0 0.0
          %447 = vmatpush1.msra.mxu0 0.0
          %448 = vmatprep.subr.mxu0 0.0
          %449 = vmatpush1.msra.mxu0 0.0
          %450 = vmatprep.subr.mxu0 0.0
          %451 = vmatpush1.msra.mxu0 0.0
          %452 = vmatprep.subr.mxu0 0.0
          %453 = vmatpush1.msra.mxu0 0.0
          %454 = vmatprep.subr.mxu0 0.0
          %455 = vmatpush1.msra.mxu0 0.0
          %456 = vmatprep.subr.mxu0 0.0
          %457 = vmatpush1.msra.mxu0 0.0
          %458 = vmatprep.subr.mxu0 0.0
          %459 = vmatpush1.msra.mxu0 0.0
          %460 = vmatprep.subr.mxu0 0.0
          %461 = vmatpush1.msra.mxu0 0.0
          %462 = vmatprep.subr.mxu0 0.0
          %463 = vmatpush1.msra.mxu0 0.0
          %464 = vmatprep.mubr.f32.mxu0 0.0
          %465 = vmatmul.mubr.f32.gmra.mrb[0].mxu0 %v377
          %v466 = vpop.f32.mrb[0].mxu0
          %v467 = vadd.f32 0.0, %v466
          %v468 = vpop.f32.mrb[0].mxu0
          %469 = vmatprep.mubr.f32.mxu0 0.0
          %470 = vmatmul.mubr.f32.gmra.mrb[0].mxu0 %v380
          %v471 = vpop.f32.mrb[0].mxu0
          %v472 = vadd.f32 0.0, %v471
          %v473 = vpop.f32.mrb[0].mxu0
          %474 = vmatprep.mubr.f32.mxu0 0.0
          %475 = vmatmul.mubr.f32.gmra.mrb[0].mxu0 %v383
          %v476 = vpop.f32.mrb[0].mxu0
          %v477 = vadd.f32 0.0, %v476
          %v478 = vpop.f32.mrb[0].mxu0
          %479 = vmatprep.mubr.f32.mxu0 0.0
          %480 = vmatmul.mubr.f32.gmra.mrb[0].mxu0 %v386
          %v481 = vpop.f32.mrb[0].mxu0
          %v482 = vadd.f32 0.0, %v481
          %v483 = vpop.f32.mrb[0].mxu0
          %484 = vmatprep.mubr.f32.mxu0 0.0
          %485 = vmatmul.mubr.f32.gmra.mrb[0].mxu0 %v389
          %v486 = vpop.f32.mrb[0].mxu0
          %v487 = vadd.f32 0.0, %v486
          %v488 = vpop.f32.mrb[0].mxu0
          %489 = vmatprep.mubr.f32.mxu0 0.0
          %490 = vmatmul.mubr.f32.gmra.mrb[0].mxu0 %v392
          %v491 = vpop.f32.mrb[0].mxu0
          %v492 = vadd.f32 0.0, %v491
          %v493 = vpop.f32.mrb[0].mxu0
          %494 = vmatprep.mubr.f32.mxu0 0.0
          %495 = vmatmul.mubr.f32.gmra.mrb[0].mxu0 %v395
          %v496 = vpop.f32.mrb[0].mxu0
          %v497 = vadd.f32 0.0, %v496
          %v498 = vpop.f32.mrb[0].mxu0
          %499 = vmatprep.mubr.f32.mxu0 0.0
          %500 = vmatmul.mubr.f32.gmra.mrb[0].mxu0 %v398
          %v501 = vpop.f32.mrb[0].mxu0
          %v502 = vadd.f32 0.0, %v501
          %v503 = vpop.f32.mrb[0].mxu0
          %504 = vdwg.mxu0
          %v505 = vmul.f32 %v467, %v240
          %v506 = vmul.f32 %v472, %v241
          %v507 = vmul.f32 %v477, %v242
          %v508 = vmul.f32 %v482, %v243
          %v509 = vmul.f32 %v487, %v244
          %v510 = vmul.f32 %v492, %v245
          %v511 = vmul.f32 %v497, %v246
          %v512 = vmul.f32 %v502, %v247
          %v513 = vadd.f32 %v505, %v248
          %v514 = vadd.f32 %v506, %v249
          %v515 = vadd.f32 %v507, %v250
          %v516 = vadd.f32 %v508, %v251
          %v517 = vadd.f32 %v509, %v252
          %v518 = vadd.f32 %v510, %v253
          %v519 = vadd.f32 %v511, %v254
          %v520 = vadd.f32 %v512, %v255
        $region49: #{tpu_custom_call.1} parent=31 // loop_footer
          %s261 = sadd.s32 1, %s257
        $region50: #{tpu_custom_call.1} parent=31 // loop_footer_branch
          %256 = sbr.rel target = $region46
        $region51: #{tpu_custom_call.1} parent=31 // loop_exit
          _
        %521 = vmatprep.subr.mxu0 0.0
        %522 = vmatpush1.msra.mxu0 %v216
        %523 = vmatprep.subr.mxu0 0.0
        %524 = vmatpush1.msra.mxu0 %v217
        %525 = vmatprep.subr.mxu0 0.0
        %526 = vmatpush1.msra.mxu0 %v218
        %527 = vmatprep.subr.mxu0 0.0
        %528 = vmatpush1.msra.mxu0 %v219
        %529 = vmatprep.subr.mxu0 0.0
        %530 = vmatpush1.msra.mxu0 %v220
        %531 = vmatprep.subr.mxu0 0.0
        %532 = vmatpush1.msra.mxu0 %v221
        %533 = vmatprep.subr.mxu0 0.0
        %534 = vmatpush1.msra.mxu0 %v222
        %535 = vmatprep.subr.mxu0 0.0
        %536 = vmatpush1.msra.mxu0 %v223
        %537 = vmatprep.subr.mxu0 0.0
        %538 = vmatpush1.msra.mxu0 %v224
        %539 = vmatprep.subr.mxu0 0.0
        %540 = vmatpush1.msra.mxu0 %v225
        %541 = vmatprep.subr.mxu0 0.0
        %542 = vmatpush1.msra.mxu0 %v226
        %543 = vmatprep.subr.mxu0 0.0
        %544 = vmatpush1.msra.mxu0 %v227
        %545 = vmatprep.subr.mxu0 0.0
        %546 = vmatpush1.msra.mxu0 %v228
        %547 = vmatprep.subr.mxu0 0.0
        %548 = vmatpush1.msra.mxu0 %v229
        %549 = vmatprep.subr.mxu0 0.0
        %550 = vmatpush1.msra.mxu0 %v230
        %551 = vmatprep.subr.mxu0 0.0
        %552 = vmatpush1.msra.mxu0 %v231
        %553 = vmatprep.subr.mxu0 0.0
        %554 = vmatpush1.msra.mxu0 0.0
        %555 = vmatprep.subr.mxu0 0.0
        %556 = vmatpush1.msra.mxu0 0.0
        %557 = vmatprep.subr.mxu0 0.0
        %558 = vmatpush1.msra.mxu0 0.0
        %559 = vmatprep.subr.mxu0 0.0
        %560 = vmatpush1.msra.mxu0 0.0
        %561 = vmatprep.subr.mxu0 0.0
        %562 = vmatpush1.msra.mxu0 0.0
        %563 = vmatprep.subr.mxu0 0.0
        %564 = vmatpush1.msra.mxu0 0.0
        %565 = vmatprep.subr.mxu0 0.0
        %566 = vmatpush1.msra.mxu0 0.0
        %567 = vmatprep.subr.mxu0 0.0
        %568 = vmatpush1.msra.mxu0 0.0
        %569 = vmatprep.subr.mxu0 0.0
        %570 = vmatpush1.msra.mxu0 0.0
        %571 = vmatprep.subr.mxu0 0.0
        %572 = vmatpush1.msra.mxu0 0.0
        %573 = vmatprep.subr.mxu0 0.0
        %574 = vmatpush1.msra.mxu0 0.0
        %575 = vmatprep.subr.mxu0 0.0
        %576 = vmatpush1.msra.mxu0 0.0
        %577 = vmatprep.subr.mxu0 0.0
        %578 = vmatpush1.msra.mxu0 0.0
        %579 = vmatprep.subr.mxu0 0.0
        %580 = vmatpush1.msra.mxu0 0.0
        %581 = vmatprep.subr.mxu0 0.0
        %582 = vmatpush1.msra.mxu0 0.0
        %583 = vmatprep.subr.mxu0 0.0
        %584 = vmatpush1.msra.mxu0 0.0
        %585 = vmatprep.mubr.f32.mxu0 0.0
        %586 = vmatmul.mubr.f32.gmra.mrb[0].mxu0 %v262
        %v587 = vpop.f32.mrb[0].mxu0
        %v588 = vadd.f32 0.0, %v587
        %v589 = vpop.f32.mrb[0].mxu0
        %590 = vmatprep.mubr.f32.mxu0 0.0
        %591 = vmatmul.mubr.f32.gmra.mrb[0].mxu0 %v263
        %v592 = vpop.f32.mrb[0].mxu0
        %v593 = vadd.f32 0.0, %v592
        %v594 = vpop.f32.mrb[0].mxu0
        %595 = vmatprep.mubr.f32.mxu0 0.0
        %596 = vmatmul.mubr.f32.gmra.mrb[0].mxu0 %v264
        %v597 = vpop.f32.mrb[0].mxu0
        %v598 = vadd.f32 0.0, %v597
        %v599 = vpop.f32.mrb[0].mxu0
        %600 = vmatprep.mubr.f32.mxu0 0.0
        %601 = vmatmul.mubr.f32.gmra.mrb[0].mxu0 %v265
        %v602 = vpop.f32.mrb[0].mxu0
        %v603 = vadd.f32 0.0, %v602
        %v604 = vpop.f32.mrb[0].mxu0
        %605 = vmatprep.mubr.f32.mxu0 0.0
        %606 = vmatmul.mubr.f32.gmra.mrb[0].mxu0 %v266
        %v607 = vpop.f32.mrb[0].mxu0
        %v608 = vadd.f32 0.0, %v607
        %v609 = vpop.f32.mrb[0].mxu0
        %610 = vmatprep.mubr.f32.mxu0 0.0
        %611 = vmatmul.mubr.f32.gmra.mrb[0].mxu0 %v267
        %v612 = vpop.f32.mrb[0].mxu0
        %v613 = vadd.f32 0.0, %v612
        %v614 = vpop.f32.mrb[0].mxu0
        %615 = vmatprep.mubr.f32.mxu0 0.0
        %616 = vmatmul.mubr.f32.gmra.mrb[0].mxu0 %v268
        %v617 = vpop.f32.mrb[0].mxu0
        %v618 = vadd.f32 0.0, %v617
        %v619 = vpop.f32.mrb[0].mxu0
        %620 = vmatprep.mubr.f32.mxu0 0.0
        %621 = vmatmul.mubr.f32.gmra.mrb[0].mxu0 %v269
        %v622 = vpop.f32.mrb[0].mxu0
        %v623 = vadd.f32 0.0, %v622
        %v624 = vpop.f32.mrb[0].mxu0
        %625 = vdwg.mxu0
        %vm626 = vcmask 523264
        %v628 = vsel %vm626, %v232, 0
        %v631 = vsel %vm626, %v233, 0
        %v634 = vsel %vm626, %v234, 0
        %v637 = vsel %vm626, %v235, 0
        %v640 = vsel %vm626, %v236, 0
        %v643 = vsel %vm626, %v237, 0
        %v646 = vsel %vm626, %v238, 0
        %v649 = vsel %vm626, %v239, 0
        %651 = vmatprep.subr.mxu0 0.0
        %652 = vmatpush1.msra.mxu0 %v588
        %653 = vmatprep.subr.mxu0 0.0
        %654 = vmatpush1.msra.mxu0 %v593
        %655 = vmatprep.subr.mxu0 0.0
        %656 = vmatpush1.msra.mxu0 %v598
        %657 = vmatprep.subr.mxu0 0.0
        %658 = vmatpush1.msra.mxu0 %v603
        %659 = vmatprep.subr.mxu0 0.0
        %660 = vmatpush1.msra.mxu0 %v608
        %661 = vmatprep.subr.mxu0 0.0
        %662 = vmatpush1.msra.mxu0 %v613
        %663 = vmatprep.subr.mxu0 0.0
        %664 = vmatpush1.msra.mxu0 %v618
        %665 = vmatprep.subr.mxu0 0.0
        %666 = vmatpush1.msra.mxu0 %v623
        %667 = vmatprep.subr.mxu0 0.0
        %668 = vmatpush1.msra.mxu0 0.0
        %669 = vmatprep.subr.mxu0 0.0
        %670 = vmatpush1.msra.mxu0 0.0
        %671 = vmatprep.subr.mxu0 0.0
        %672 = vmatpush1.msra.mxu0 0.0
        %673 = vmatprep.subr.mxu0 0.0
        %674 = vmatpush1.msra.mxu0 0.0
        %675 = vmatprep.subr.mxu0 0.0
        %676 = vmatpush1.msra.mxu0 0.0
        %677 = vmatprep.subr.mxu0 0.0
        %678 = vmatpush1.msra.mxu0 0.0
        %679 = vmatprep.subr.mxu0 0.0
        %680 = vmatpush1.msra.mxu0 0.0
        %681 = vmatprep.subr.mxu0 0.0
        %682 = vmatpush1.msra.mxu0 0.0
        %683 = vmatprep.subr.mxu0 0.0
        %684 = vmatpush1.msra.mxu0 0.0
        %685 = vmatprep.subr.mxu0 0.0
        %686 = vmatpush1.msra.mxu0 0.0
        %687 = vmatprep.subr.mxu0 0.0
        %688 = vmatpush1.msra.mxu0 0.0
        %689 = vmatprep.subr.mxu0 0.0
        %690 = vmatpush1.msra.mxu0 0.0
        %691 = vmatprep.subr.mxu0 0.0
        %692 = vmatpush1.msra.mxu0 0.0
        %693 = vmatprep.subr.mxu0 0.0
        %694 = vmatpush1.msra.mxu0 0.0
        %695 = vmatprep.subr.mxu0 0.0
        %696 = vmatpush1.msra.mxu0 0.0
        %697 = vmatprep.subr.mxu0 0.0
        %698 = vmatpush1.msra.mxu0 0.0
        %699 = vmatprep.subr.mxu0 0.0
        %700 = vmatpush1.msra.mxu0 0.0
        %701 = vmatprep.subr.mxu0 0.0
        %702 = vmatpush1.msra.mxu0 0.0
        %703 = vmatprep.subr.mxu0 0.0
        %704 = vmatpush1.msra.mxu0 0.0
        %705 = vmatprep.subr.mxu0 0.0
        %706 = vmatpush1.msra.mxu0 0.0
        %707 = vmatprep.subr.mxu0 0.0
        %708 = vmatpush1.msra.mxu0 0.0
        %709 = vmatprep.subr.mxu0 0.0
        %710 = vmatpush1.msra.mxu0 0.0
        %711 = vmatprep.subr.mxu0 0.0
        %712 = vmatpush1.msra.mxu0 0.0
        %713 = vmatprep.subr.mxu0 0.0
        %714 = vmatpush1.msra.mxu0 0.0
        %715 = vmatprep.mubr.f32.mxu0 0.0
        %716 = vmatmul.mubr.f32.gmra.mrb[0].mxu0 %v628
        %v717 = vpop.f32.mrb[0].mxu0
        %v718 = vadd.f32 0.0, %v717
        %v719 = vpop.f32.mrb[0].mxu0
        %720 = vmatprep.mubr.f32.mxu0 0.0
        %721 = vmatmul.mubr.f32.gmra.mrb[0].mxu0 %v631
        %v722 = vpop.f32.mrb[0].mxu0
        %v723 = vadd.f32 0.0, %v722
        %v724 = vpop.f32.mrb[0].mxu0
        %725 = vmatprep.mubr.f32.mxu0 0.0
        %726 = vmatmul.mubr.f32.gmra.mrb[0].mxu0 %v634
        %v727 = vpop.f32.mrb[0].mxu0
        %v728 = vadd.f32 0.0, %v727
        %v729 = vpop.f32.mrb[0].mxu0
        %730 = vmatprep.mubr.f32.mxu0 0.0
        %731 = vmatmul.mubr.f32.gmra.mrb[0].mxu0 %v637
        %v732 = vpop.f32.mrb[0].mxu0
        %v733 = vadd.f32 0.0, %v732
        %v734 = vpop.f32.mrb[0].mxu0
        %735 = vmatprep.mubr.f32.mxu0 0.0
        %736 = vmatmul.mubr.f32.gmra.mrb[0].mxu0 %v640
        %v737 = vpop.f32.mrb[0].mxu0
        %v738 = vadd.f32 0.0, %v737
        %v739 = vpop.f32.mrb[0].mxu0
        %740 = vmatprep.mubr.f32.mxu0 0.0
        %741 = vmatmul.mubr.f32.gmra.mrb[0].mxu0 %v643
        %v742 = vpop.f32.mrb[0].mxu0
        %v743 = vadd.f32 0.0, %v742
        %v744 = vpop.f32.mrb[0].mxu0
        %745 = vmatprep.mubr.f32.mxu0 0.0
        %746 = vmatmul.mubr.f32.gmra.mrb[0].mxu0 %v646
        %v747 = vpop.f32.mrb[0].mxu0
        %v748 = vadd.f32 0.0, %v747
        %v749 = vpop.f32.mrb[0].mxu0
        %750 = vmatprep.mubr.f32.mxu0 0.0
        %751 = vmatmul.mubr.f32.gmra.mrb[0].mxu0 %v649
        %v752 = vpop.f32.mrb[0].mxu0
        %v753 = vadd.f32 0.0, %v752
        %v754 = vpop.f32.mrb[0].mxu0
        %755 = vdwg.mxu0
        %v756 = vmul.f32 %v718, %v240
        %v757 = vmul.f32 %v723, %v241
        %v758 = vmul.f32 %v728, %v242
        %v759 = vmul.f32 %v733, %v243
        %v760 = vmul.f32 %v738, %v244
        %v761 = vmul.f32 %v743, %v245
        %v762 = vmul.f32 %v748, %v246
        %v763 = vmul.f32 %v753, %v247
        %764 = vst [vmem:[%s215] sm:$0xff] %v756
        %765 = vst [vmem:[%s215 + $0x8] sm:$0xff] %v757
        %766 = vst [vmem:[%s215 + $0x10] sm:$0xff] %v758
        %767 = vst [vmem:[%s215 + $0x18] sm:$0xff] %v759
        %768 = vst [vmem:[%s215 + $0x20] sm:$0xff] %v760
        %769 = vst [vmem:[%s215 + $0x28] sm:$0xff] %v761
        %770 = vst [vmem:[%s215 + $0x30] sm:$0xff] %v762
        %771 = vst [vmem:[%s215 + $0x38] sm:$0xff] %v763
        %s772 = sand.u32 %s95, 1
        %s773 = scalar_lea.sflag [#allocation4], %s772
        %s774 = sand.u32 %s95, 1
        %s775 = smul.addr %s774, 64
        %s776 = scalar_lea.vmem [#allocation8], %s775
        // Predicated region
        $region52: #{tpu_custom_call.1} parent=31 // pred_check
          %p777 = pneg %p105
        $region53: #{tpu_custom_call.1} parent=31 // pred_check_branch
          %779 = sbr.rel (%p777) target = $region55
        $region54: #{tpu_custom_call.1} parent=31 // pred_region
          %s781 = ssub.s32 1024, 1024
          %782 = vsyncadd %s773, %s781
          %s783 = smul.addr %s19, 8
          %s784 = smul.addr %s783, 128
          %s785 = scalar_lea.hbm %s3, %s784
          %s786 = sshll.u32 %s776, 4
          %s787 = int_to_ptr.vmem [resolvable:$true] %s786
          %792 = dma.vmem_to_hbm [thread:$0]  %s787, 1024, %s785, %s773, 128, 128, 8
        $region55: #{tpu_custom_call.1} parent=31 // pred_fallthru
          _
      $region32: #{tpu_custom_call.1} parent=5 // pred_fallthru
        _
      %p793 = scmp.le.s32.totalorder 2, %s14
      // Predicated region
      $region56: #{tpu_custom_call.1} parent=5 // pred_check
        %p794 = pneg %p793
      $region57: #{tpu_custom_call.1} parent=5 // pred_check_branch
        %796 = sbr.rel (%p794) target = $region59
      $region58: #{tpu_custom_call.1} parent=5 // pred_region
        %s797 = ssub.s32 %s14, 2
        // Predicated region
        $region60: #{tpu_custom_call.1} parent=58 // pred_check
          %p798 = pneg %p111
        $region61: #{tpu_custom_call.1} parent=58 // pred_check_branch
          %800 = sbr.rel (%p798) target = $region63
        $region62: #{tpu_custom_call.1} parent=58 // pred_region
          %s801 = sand.u32 %s96, 1
          %s802 = scalar_lea.sflag [#allocation4], %s801
          %s803 = sand.u32 %s96, 1
          %s804 = smul.addr %s803, 64
          %s805 = scalar_lea.vmem [#allocation8], %s804
          %806 = dma.done %s802, 1024
        $region63: #{tpu_custom_call.1} parent=58 // pred_fallthru
          _
      $region59: #{tpu_custom_call.1} parent=5 // pred_fallthru
        _
    $region6: #{tpu_custom_call.1} parent=1 // loop_footer
      %s18 = sadd.s32 1, %s14
    $region7: #{tpu_custom_call.1} parent=1 // loop_footer_branch
      %13 = sbr.rel target = $region3
    $region8: #{tpu_custom_call.1} parent=1 // loop_exit
      _
    %807 = vsyncpa [#allocation3], 1
    %s808 = scalar_lea.sflag [#allocation3], 1
    %809 = vsyncpa %s808, 1
    %810 = vsyncpa [#allocation6], 1
    %811 = vsyncpa [#allocation4], 1
    %s812 = scalar_lea.sflag [#allocation4], 1
    %813 = vsyncpa %s812, 1

</llo_original>
